<compile_context>
chip_gen: v7x
topology: tpu7x:2x2x1
jax: 0.10.0
libtpu: 0.0.40
codegen_flags: <defaults>
</compile_context>

<pallas_src>
from functools import partial

import jax
import jax.numpy as jnp
import numpy as np
from jax import lax
from jax.experimental import pallas as pl
from jax.experimental.pallas import tpu as pltpu


def _build_pe_table(d_model: int, max_len: int) -> jnp.ndarray:
    """Replicates the __init__ buffer: pe of shape [max_len, 1, d_model]."""
    position = np.arange(0, max_len, dtype=np.float32)[:, None]           # (L, 1)
    div_term = np.exp(
        np.arange(0, d_model, 2, dtype=np.float32) * (-np.log(10000.0) / d_model)
    )                                                                      # (D/2,)
    pe = np.zeros((max_len, d_model), dtype=np.float32)
    pe[:, 0::2] = np.sin(position * div_term)
    pe[:, 1::2] = np.cos(position * div_term)
    return jnp.asarray(pe[:, None, :])                                     # (L, 1, D)


def _pe_kernel(seed_ref, x_ref, pe_ref, o_ref, *, p: float, training: bool):
    # x_ref : (tS, B, D) block of x in VMEM
    # pe_ref: (tS, 1, D) block of the PE table -> broadcast over batch
    tS, B, D = x_ref.shape
    y = x_ref[...].astype(jnp.float32) + pe_ref[...]

    if training and p > 0.0:
        # Inverted dropout with a grid-invariant counter-based PRNG: hash the
        # global element index together with the seed; keep iff bits >= p*2^32.
        seed = seed_ref[0].astype(jnp.uint32)
        s_ids = lax.broadcasted_iota(jnp.int32, (tS, B, D), 0) + pl.program_id(0) * tS
        b_ids = lax.broadcasted_iota(jnp.int32, (tS, B, D), 1)
        d_ids = lax.broadcasted_iota(jnp.int32, (tS, B, D), 2)
        flat = (s_ids * B + b_ids) * D + d_ids

        h = flat.astype(jnp.uint32) + seed * jnp.uint32(0x9E3779B9)
        h = (h ^ (h >> 16)) * jnp.uint32(0x7FEB352D)   # splitmix32 / lowbias32 mixer
        h = (h ^ (h >> 15)) * jnp.uint32(0x846CA68B)
        h = h ^ (h >> 16)

        thresh = jnp.uint32(min(int(round(p * 2.0 ** 32)), 2 ** 32 - 1))
        keep = h >= thresh                              # P(keep) = 1 - p
        y = jnp.where(keep, y * jnp.float32(1.0 / (1.0 - p)), jnp.float32(0.0))

    o_ref[...] = y.astype(o_ref.dtype)


def positional_encoding_forward(x, pe_table, *, p=0.1, training=False, seed=0,
                                target_block_bytes=2 * 1024 * 1024):
    """
    x:        [seq_len, batch, d_model]   (float32 or bf16; math done in f32)
    pe_table: [max_len, 1, d_model] float32 (precomputed __init__ buffer)
    """
    S, B, D = x.shape
    max_len = pe_table.shape[0]
    assert pe_table.shape == (max_len, 1, D) and max_len >= S

    itemsize = jnp.dtype(x.dtype).itemsize
    row_bytes = B * D * itemsize
    tS = max(1, target_block_bytes // row_bytes)
    if tS >= 8:
        tS -= tS % 8                     # keep seq tiles a multiple of 8 rows
    tS = min(tS, S)
    grid = (pl.cdiv(S, tS),)

    # VMEM budget: double-buffered x-in + out blocks + double-buffered pe block,
    # then 2x headroom, capped so it is legal on every generation (v7x = 64 MiB).
    working_set = (4 * tS * B * D * itemsize            # 2 bufs x (x + out)
                   + 2 * tS * D * pe_table.dtype.itemsize)
    vmem_limit = int(min(max(2 * working_set, 4 * 1024 * 1024), 32 * 1024 * 1024))

    seed_arr = jnp.asarray([seed], dtype=jnp.int32)
    kernel = partial(_pe_kernel, p=float(p), training=bool(training))

    return pl.pallas_call(
        kernel,
        out_shape=jax.ShapeDtypeStruct((S, B, D), x.dtype),
        grid=grid,
        in_specs=[
            pl.BlockSpec(memory_space=pltpu.MemorySpace.SMEM),       # seed scalar
            pl.BlockSpec((tS, B, D), lambda i: (i, 0, 0)),           # x seq tile
            pl.BlockSpec((tS, 1, D), lambda i: (i, 0, 0)),           # pe rows of tile
        ],
        out_specs=pl.BlockSpec((tS, B, D), lambda i: (i, 0, 0)),
        compiler_params=pltpu.CompilerParams(
            dimension_semantics=("parallel",),
            vmem_limit_bytes=vmem_limit,
        ),
    )(seed_arr, x, pe_table)


if __name__ == "__main__":
    # Small shapes consistent with forward(): [seq_len, batch, d_model].
    seq_len, batch, d_model = 64, 8, 128
    max_len = 128
    p = 0.1

    key = jax.random.PRNGKey(0)
    x = jax.random.normal(key, (seq_len, batch, d_model), dtype=jnp.float32)
    pe_table = _build_pe_table(d_model, max_len)
    ref = x + pe_table[:seq_len]                     # broadcast over batch

    # --- eval mode (dropout = identity), default tile ------------------------
    out_eval = positional_encoding_forward(x, pe_table, p=p, training=False)
    out_eval = jax.block_until_ready(out_eval)
    assert out_eval.shape == (seq_len, batch, d_model)
    assert jnp.allclose(out_eval, ref, atol=1e-6, rtol=1e-6)

    # --- eval mode with a forced multi-step grid (exercises tiling/pipelining)
    out_tiled = positional_encoding_forward(
        x, pe_table, p=p, training=False, target_block_bytes=64 * 1024)
    out_tiled = jax.block_until_ready(out_tiled)
    assert jnp.allclose(out_tiled, ref, atol=1e-6, rtol=1e-6)

    # --- training mode: each output element is 0 or (x+pe)/(1-p) -------------
    out_train = positional_encoding_forward(
        x, pe_table, p=p, training=True, seed=42, target_block_bytes=64 * 1024)
    out_train = jax.block_until_ready(out_train)
    scaled_ref = ref * (1.0 / (1.0 - p))
    dropped = out_train == 0.0
    kept_ok = jnp.isclose(out_train, scaled_ref, atol=1e-5, rtol=1e-5)
    assert bool(jnp.all(dropped | kept_ok))
    drop_frac = float(jnp.mean(dropped.astype(jnp.float32)))
    assert abs(drop_frac - p) < 0.05, drop_frac

    print("KERNEL_OK")
</pallas_src>

<mosaic_0001>
module attributes {stable_mosaic.version = 11 : i64} {
  func.func @_pe_kernel(%arg0: i32, %arg1: memref<1xi32, #tpu.memory_space<smem>>, %arg2: memref<64x8x128xf32, #tpu.memory_space<vmem>>, %arg3: memref<64x1x128xf32, #tpu.memory_space<vmem>>, %arg4: memref<64x8x128xf32, #tpu.memory_space<vmem>>) attributes {dimension_semantics = [#tpu.dimension_semantics<parallel>], iteration_bounds = array<i64: 1>, scalar_prefetch = 0 : i64, scratch_operands = 0 : i64, tpu.core_type = #tpu.core_type<tc>, window_params = [{transform_indices = @transform_0, window_bounds = array<i64: 1>}, {transform_indices = @transform_1, window_bounds = array<i64: 64, 8, 128>}, {transform_indices = @transform_2, window_bounds = array<i64: 64, 1, 128>}, {transform_indices = @transform_3, window_bounds = array<i64: 64, 8, 128>}]} {
    %c0 = arith.constant 0 : index
    %c0_0 = arith.constant 0 : index
    %c0_1 = arith.constant 0 : index
    %0 = vector.load %arg2[%c0, %c0_0, %c0_1] : memref<64x8x128xf32, #tpu.memory_space<vmem>>, vector<64x8x128xf32>
    %c0_2 = arith.constant 0 : index
    %c0_3 = arith.constant 0 : index
    %c0_4 = arith.constant 0 : index
    %1 = vector.load %arg3[%c0_2, %c0_3, %c0_4] : memref<64x1x128xf32, #tpu.memory_space<vmem>>, vector<64x1x128xf32>
    %2 = vector.broadcast %1 : vector<64x1x128xf32> to vector<64x8x128xf32>
    %3 = arith.addf %0, %2 : vector<64x8x128xf32>
    %c0_5 = arith.constant 0 : index
    %c0_6 = arith.constant 0 : index
    %c0_7 = arith.constant 0 : index
    %4 = vector.load %arg4[%c0_5, %c0_6, %c0_7] : memref<64x8x128xf32, #tpu.memory_space<vmem>>, vector<64x8x128xf32>
    tpu.vector_store %arg4[%c0_5, %c0_6, %c0_7], %3 {strides = array<i32>} : memref<64x8x128xf32, #tpu.memory_space<vmem>>, vector<64x8x128xf32>,
    return
  }
  func.func @transform_0(%arg0: i32) -> i32 {
    %c0_i32 = arith.constant 0 : i32
    %c0_i32_0 = arith.constant 0 : i32
    return %c0_i32 : i32
  }
  func.func @transform_1(%arg0: i32) -> (i32, i32, i32) {
    %c0_i32 = arith.constant 0 : i32
    %c0_i32_0 = arith.constant 0 : i32
    %c0_i32_1 = arith.constant 0 : i32
    return %arg0, %c0_i32, %c0_i32_0 : i32, i32, i32
  }
  func.func @transform_2(%arg0: i32) -> (i32, i32, i32) {
    %c0_i32 = arith.constant 0 : i32
    %c0_i32_0 = arith.constant 0 : i32
    %c0_i32_1 = arith.constant 0 : i32
    return %arg0, %c0_i32, %c0_i32_0 : i32, i32, i32
  }
  func.func @transform_3(%arg0: i32) -> (i32, i32, i32) {
    %c0_i32 = arith.constant 0 : i32
    %c0_i32_0 = arith.constant 0 : i32
    %c0_i32_1 = arith.constant 0 : i32
    return %arg0, %c0_i32, %c0_i32_0 : i32, i32, i32
  }
}

</mosaic_0001>

<llo_original>
// kernel: tpu_custom_call.1
$region0: #{tpu_custom_call.1}
  #allocation0 [shape = 'u32[]', space=smem, size = 0x4, offset = 0x4, fixed_abs, tag = 'smem constant byte address 0x4 - core index']
  #allocation1 [shape = 'u32[144,128]{1,0:T(1,128)}', space=vmem, size = 0x12000, scoped, tag = 'internal scratch']
  #allocation2 [shape = 's32[1]{0:T(128)S(6)}', space=smem, size = 0x200, scoped, tag = 'scoped memory for tpu_custom_call.1']
  %s0 = inlined_call_operand.<no memory space> [shape: s32[1], index: 0, kind: input, shape index: {}]
  %s1 = inlined_call_operand.hbm [shape: f32[64,8,128], index: 1, kind: input, shape index: {}]
  %s2 = inlined_call_operand.hbm [shape: f32[128,1,128], index: 2, kind: input, shape index: {}]
  %s3 = inlined_call_operand.hbm [shape: f32[64,8,128], index: 3, kind: output, shape index: {}]
  %s4 = sld [smem:[#allocation0]]
  $region30: #{tpu_custom_call.1} parent=0
    _
  %s6 = ssub.s32 1, %s4
  %s7 = scalar_select 0, %s6, %s4
  %8 = sst [smem:[#allocation2]] %s0
  $region1: #{tpu_custom_call.1} parent=0
    #allocation3 [shape = 'u8[262144]{0}', space=vmem, size = 0x40000, scoped, tag = 'input window, operand 1, single buffered']
    #allocation4 [shape = 's32[1]{0}', space=sflag, size = 0x4, scoped, tag = 'scoped memory for tpu_custom_call.1']
    #allocation5 [shape = 's32[1]{0}', space=sflag, size = 0x4, scoped, tag = 'scoped memory for tpu_custom_call.1']
    #allocation6 [shape = 'u8[32768]{0}', space=vmem, size = 0x8000, scoped, tag = 'input window, operand 2, single buffered']
    #allocation7 [shape = 's32[1]{0}', space=sflag, size = 0x4, scoped, tag = 'scoped memory for tpu_custom_call.1']
    #allocation8 [shape = 'u8[262144]{0}', space=vmem, size = 0x40000, scoped, tag = 'output window, operand 0, single buffered']
    %9 = vsyncpa [#allocation4], 0
    %10 = vsyncpa [#allocation7], 0
    %11 = vsyncpa [#allocation5], 0
    // Predicated region
    $region2: #{tpu_custom_call.1} parent=1 // pred_check
      _
    $region3: #{tpu_custom_call.1} parent=1 // pred_check_branch
      %13 = sbr.rel (0) target = $region5
    $region4: #{tpu_custom_call.1} parent=1 // pred_region
      _
    $region5: #{tpu_custom_call.1} parent=1 // pred_fallthru
      _
    // Predicated region
    $region6: #{tpu_custom_call.1} parent=1 // pred_check
      _
    $region7: #{tpu_custom_call.1} parent=1 // pred_check_branch
      %15 = sbr.rel (0) target = $region9
    $region8: #{tpu_custom_call.1} parent=1 // pred_region
      %s17 = ssub.s32 8192, 8192
      %18 = vsyncadd [#allocation4], %s17
      %s19 = sshll.u32 [#allocation3], 4
      %s20 = int_to_ptr.vmem [resolvable:$true] %s19
      %25 = dma.hbm_to_vmem [thread:$0]  %s1, 8192, %s20, [#allocation4], 128, 128, 8
    $region9: #{tpu_custom_call.1} parent=1 // pred_fallthru
      _
    // Predicated region
    $region10: #{tpu_custom_call.1} parent=1 // pred_check
      _
    $region11: #{tpu_custom_call.1} parent=1 // pred_check_branch
      %27 = sbr.rel (0) target = $region13
    $region12: #{tpu_custom_call.1} parent=1 // pred_region
      %s29 = ssub.s32 1024, 1024
      %30 = vsyncadd [#allocation7], %s29
      %s31 = sshll.u32 [#allocation6], 4
      %s32 = int_to_ptr.vmem [resolvable:$true] %s31
      %37 = dma.hbm_to_vmem [thread:$0]  %s2, 1024, %s32, [#allocation7], 16, 16, 1
    $region13: #{tpu_custom_call.1} parent=1 // pred_fallthru
      _
    // Predicated region
    $region14: #{tpu_custom_call.1} parent=1 // pred_check
      _
    $region15: #{tpu_custom_call.1} parent=1 // pred_check_branch
      %39 = sbr.rel (0) target = $region17
    $region16: #{tpu_custom_call.1} parent=1 // pred_region
      %40 = dma.done [#allocation4], 8192
    $region17: #{tpu_custom_call.1} parent=1 // pred_fallthru
      _
    // Predicated region
    $region18: #{tpu_custom_call.1} parent=1 // pred_check
      _
    $region19: #{tpu_custom_call.1} parent=1 // pred_check_branch
      %42 = sbr.rel (0) target = $region21
    $region20: #{tpu_custom_call.1} parent=1 // pred_region
      %43 = dma.done [#allocation7], 1024
    $region21: #{tpu_custom_call.1} parent=1 // pred_fallthru
      _
    %v44 = vld [vmem:[#allocation3] sm:$0xff]
    %v45 = vld [vmem:[#allocation3 + $0x8] sm:$0xff]
    %v46 = vld [vmem:[#allocation3 + $0x10] sm:$0xff]
    %v47 = vld [vmem:[#allocation3 + $0x18] sm:$0xff]
    %v48 = vld [vmem:[#allocation3 + $0x20] sm:$0xff]
    %v49 = vld [vmem:[#allocation3 + $0x28] sm:$0xff]
    %v50 = vld [vmem:[#allocation3 + $0x30] sm:$0xff]
    %v51 = vld [vmem:[#allocation3 + $0x38] sm:$0xff]
    %v52 = vld [vmem:[#allocation3 + $0x40] sm:$0xff]
    %v53 = vld [vmem:[#allocation3 + $0x48] sm:$0xff]
    %v54 = vld [vmem:[#allocation3 + $0x50] sm:$0xff]
    %v55 = vld [vmem:[#allocation3 + $0x58] sm:$0xff]
    %v56 = vld [vmem:[#allocation3 + $0x60] sm:$0xff]
    %v57 = vld [vmem:[#allocation3 + $0x68] sm:$0xff]
    %v58 = vld [vmem:[#allocation3 + $0x70] sm:$0xff]
    %v59 = vld [vmem:[#allocation3 + $0x78] sm:$0xff]
    %v60 = vld [vmem:[#allocation3 + $0x80] sm:$0xff]
    %v61 = vld [vmem:[#allocation3 + $0x88] sm:$0xff]
    %v62 = vld [vmem:[#allocation3 + $0x90] sm:$0xff]
    %v63 = vld [vmem:[#allocation3 + $0x98] sm:$0xff]
    %v64 = vld [vmem:[#allocation3 + $0xa0] sm:$0xff]
    %v65 = vld [vmem:[#allocation3 + $0xa8] sm:$0xff]
    %v66 = vld [vmem:[#allocation3 + $0xb0] sm:$0xff]
    %v67 = vld [vmem:[#allocation3 + $0xb8] sm:$0xff]
    %v68 = vld [vmem:[#allocation3 + $0xc0] sm:$0xff]
    %v69 = vld [vmem:[#allocation3 + $0xc8] sm:$0xff]
    %v70 = vld [vmem:[#allocation3 + $0xd0] sm:$0xff]
    %v71 = vld [vmem:[#allocation3 + $0xd8] sm:$0xff]
    %v72 = vld [vmem:[#allocation3 + $0xe0] sm:$0xff]
    %v73 = vld [vmem:[#allocation3 + $0xe8] sm:$0xff]
    %v74 = vld [vmem:[#allocation3 + $0xf0] sm:$0xff]
    %v75 = vld [vmem:[#allocation3 + $0xf8] sm:$0xff]
    %v76 = vld [vmem:[#allocation3 + $0x100] sm:$0xff]
    %v77 = vld [vmem:[#allocation3 + $0x108] sm:$0xff]
    %v78 = vld [vmem:[#allocation3 + $0x110] sm:$0xff]
    %v79 = vld [vmem:[#allocation3 + $0x118] sm:$0xff]
    %v80 = vld [vmem:[#allocation3 + $0x120] sm:$0xff]
    %v81 = vld [vmem:[#allocation3 + $0x128] sm:$0xff]
    %v82 = vld [vmem:[#allocation3 + $0x130] sm:$0xff]
    %v83 = vld [vmem:[#allocation3 + $0x138] sm:$0xff]
    %v84 = vld [vmem:[#allocation3 + $0x140] sm:$0xff]
    %v85 = vld [vmem:[#allocation3 + $0x148] sm:$0xff]
    %v86 = vld [vmem:[#allocation3 + $0x150] sm:$0xff]
    %v87 = vld [vmem:[#allocation3 + $0x158] sm:$0xff]
    %v88 = vld [vmem:[#allocation3 + $0x160] sm:$0xff]
    %v89 = vld [vmem:[#allocation3 + $0x168] sm:$0xff]
    %v90 = vld [vmem:[#allocation3 + $0x170] sm:$0xff]
    %v91 = vld [vmem:[#allocation3 + $0x178] sm:$0xff]
    %v92 = vld [vmem:[#allocation3 + $0x180] sm:$0xff]
    %v93 = vld [vmem:[#allocation3 + $0x188] sm:$0xff]
    %v94 = vld [vmem:[#allocation3 + $0x190] sm:$0xff]
    %v95 = vld [vmem:[#allocation3 + $0x198] sm:$0xff]
    %v96 = vld [vmem:[#allocation3 + $0x1a0] sm:$0xff]
    %v97 = vld [vmem:[#allocation3 + $0x1a8] sm:$0xff]
    %v98 = vld [vmem:[#allocation3 + $0x1b0] sm:$0xff]
    %v99 = vld [vmem:[#allocation3 + $0x1b8] sm:$0xff]
    %v100 = vld [vmem:[#allocation3 + $0x1c0] sm:$0xff]
    %v101 = vld [vmem:[#allocation3 + $0x1c8] sm:$0xff]
    %v102 = vld [vmem:[#allocation3 + $0x1d0] sm:$0xff]
    %v103 = vld [vmem:[#allocation3 + $0x1d8] sm:$0xff]
    %v104 = vld [vmem:[#allocation3 + $0x1e0] sm:$0xff]
    %v105 = vld [vmem:[#allocation3 + $0x1e8] sm:$0xff]
    %v106 = vld [vmem:[#allocation3 + $0x1f0] sm:$0xff]
    %v107 = vld [vmem:[#allocation3 + $0x1f8] sm:$0xff]
    %v108 = vld [vmem:[#allocation6] sm:$0x1]
    %v109 = vld [vmem:[#allocation6 + $0x1] sm:$0x1]
    %v110 = vld [vmem:[#allocation6 + $0x2] sm:$0x1]
    %v111 = vld [vmem:[#allocation6 + $0x3] sm:$0x1]
    %v112 = vld [vmem:[#allocation6 + $0x4] sm:$0x1]
    %v113 = vld [vmem:[#allocation6 + $0x5] sm:$0x1]
    %v114 = vld [vmem:[#allocation6 + $0x6] sm:$0x1]
    %v115 = vld [vmem:[#allocation6 + $0x7] sm:$0x1]
    %v116 = vld [vmem:[#allocation6 + $0x8] sm:$0x1]
    %v117 = vld [vmem:[#allocation6 + $0x9] sm:$0x1]
    %v118 = vld [vmem:[#allocation6 + $0xa] sm:$0x1]
    %v119 = vld [vmem:[#allocation6 + $0xb] sm:$0x1]
    %v120 = vld [vmem:[#allocation6 + $0xc] sm:$0x1]
    %v121 = vld [vmem:[#allocation6 + $0xd] sm:$0x1]
    %v122 = vld [vmem:[#allocation6 + $0xe] sm:$0x1]
    %v123 = vld [vmem:[#allocation6 + $0xf] sm:$0x1]
    %v124 = vld [vmem:[#allocation6 + $0x10] sm:$0x1]
    %v125 = vld [vmem:[#allocation6 + $0x11] sm:$0x1]
    %v126 = vld [vmem:[#allocation6 + $0x12] sm:$0x1]
    %v127 = vld [vmem:[#allocation6 + $0x13] sm:$0x1]
    %v128 = vld [vmem:[#allocation6 + $0x14] sm:$0x1]
    %v129 = vld [vmem:[#allocation6 + $0x15] sm:$0x1]
    %v130 = vld [vmem:[#allocation6 + $0x16] sm:$0x1]
    %v131 = vld [vmem:[#allocation6 + $0x17] sm:$0x1]
    %v132 = vld [vmem:[#allocation6 + $0x18] sm:$0x1]
    %v133 = vld [vmem:[#allocation6 + $0x19] sm:$0x1]
    %v134 = vld [vmem:[#allocation6 + $0x1a] sm:$0x1]
    %v135 = vld [vmem:[#allocation6 + $0x1b] sm:$0x1]
    %v136 = vld [vmem:[#allocation6 + $0x1c] sm:$0x1]
    %v137 = vld [vmem:[#allocation6 + $0x1d] sm:$0x1]
    %v138 = vld [vmem:[#allocation6 + $0x1e] sm:$0x1]
    %v139 = vld [vmem:[#allocation6 + $0x1f] sm:$0x1]
    %v140 = vld [vmem:[#allocation6 + $0x20] sm:$0x1]
    %v141 = vld [vmem:[#allocation6 + $0x21] sm:$0x1]
    %v142 = vld [vmem:[#allocation6 + $0x22] sm:$0x1]
    %v143 = vld [vmem:[#allocation6 + $0x23] sm:$0x1]
    %v144 = vld [vmem:[#allocation6 + $0x24] sm:$0x1]
    %v145 = vld [vmem:[#allocation6 + $0x25] sm:$0x1]
    %v146 = vld [vmem:[#allocation6 + $0x26] sm:$0x1]
    %v147 = vld [vmem:[#allocation6 + $0x27] sm:$0x1]
    %v148 = vld [vmem:[#allocation6 + $0x28] sm:$0x1]
    %v149 = vld [vmem:[#allocation6 + $0x29] sm:$0x1]
    %v150 = vld [vmem:[#allocation6 + $0x2a] sm:$0x1]
    %v151 = vld [vmem:[#allocation6 + $0x2b] sm:$0x1]
    %v152 = vld [vmem:[#allocation6 + $0x2c] sm:$0x1]
    %v153 = vld [vmem:[#allocation6 + $0x2d] sm:$0x1]
    %v154 = vld [vmem:[#allocation6 + $0x2e] sm:$0x1]
    %v155 = vld [vmem:[#allocation6 + $0x2f] sm:$0x1]
    %v156 = vld [vmem:[#allocation6 + $0x30] sm:$0x1]
    %v157 = vld [vmem:[#allocation6 + $0x31] sm:$0x1]
    %v158 = vld [vmem:[#allocation6 + $0x32] sm:$0x1]
    %v159 = vld [vmem:[#allocation6 + $0x33] sm:$0x1]
    %v160 = vld [vmem:[#allocation6 + $0x34] sm:$0x1]
    %v161 = vld [vmem:[#allocation6 + $0x35] sm:$0x1]
    %v162 = vld [vmem:[#allocation6 + $0x36] sm:$0x1]
    %v163 = vld [vmem:[#allocation6 + $0x37] sm:$0x1]
    %v164 = vld [vmem:[#allocation6 + $0x38] sm:$0x1]
    %v165 = vld [vmem:[#allocation6 + $0x39] sm:$0x1]
    %v166 = vld [vmem:[#allocation6 + $0x3a] sm:$0x1]
    %v167 = vld [vmem:[#allocation6 + $0x3b] sm:$0x1]
    %v168 = vld [vmem:[#allocation6 + $0x3c] sm:$0x1]
    %v169 = vld [vmem:[#allocation6 + $0x3d] sm:$0x1]
    %v170 = vld [vmem:[#allocation6 + $0x3e] sm:$0x1]
    %v171 = vld [vmem:[#allocation6 + $0x3f] sm:$0x1]
    %v236 = vlaneseq
    %v237 = vshrl.u32 %v236, 7
    %v238 = vsub.s32 0, %v237
    %v239 = vrot.slane %v108, %v238
    %v240 = vlaneseq
    %v241 = vshrl.u32 %v240, 7
    %v242 = vsub.s32 0, %v241
    %v243 = vrot.slane %v109, %v242
    %v244 = vlaneseq
    %v245 = vshrl.u32 %v244, 7
    %v246 = vsub.s32 0, %v245
    %v247 = vrot.slane %v110, %v246
    %v248 = vlaneseq
    %v249 = vshrl.u32 %v248, 7
    %v250 = vsub.s32 0, %v249
    %v251 = vrot.slane %v111, %v250
    %v252 = vlaneseq
    %v253 = vshrl.u32 %v252, 7
    %v254 = vsub.s32 0, %v253
    %v255 = vrot.slane %v112, %v254
    %v256 = vlaneseq
    %v257 = vshrl.u32 %v256, 7
    %v258 = vsub.s32 0, %v257
    %v259 = vrot.slane %v113, %v258
    %v260 = vlaneseq
    %v261 = vshrl.u32 %v260, 7
    %v262 = vsub.s32 0, %v261
    %v263 = vrot.slane %v114, %v262
    %v264 = vlaneseq
    %v265 = vshrl.u32 %v264, 7
    %v266 = vsub.s32 0, %v265
    %v267 = vrot.slane %v115, %v266
    %v268 = vlaneseq
    %v269 = vshrl.u32 %v268, 7
    %v270 = vsub.s32 0, %v269
    %v271 = vrot.slane %v116, %v270
    %v272 = vlaneseq
    %v273 = vshrl.u32 %v272, 7
    %v274 = vsub.s32 0, %v273
    %v275 = vrot.slane %v117, %v274
    %v276 = vlaneseq
    %v277 = vshrl.u32 %v276, 7
    %v278 = vsub.s32 0, %v277
    %v279 = vrot.slane %v118, %v278
    %v280 = vlaneseq
    %v281 = vshrl.u32 %v280, 7
    %v282 = vsub.s32 0, %v281
    %v283 = vrot.slane %v119, %v282
    %v284 = vlaneseq
    %v285 = vshrl.u32 %v284, 7
    %v286 = vsub.s32 0, %v285
    %v287 = vrot.slane %v120, %v286
    %v288 = vlaneseq
    %v289 = vshrl.u32 %v288, 7
    %v290 = vsub.s32 0, %v289
    %v291 = vrot.slane %v121, %v290
    %v292 = vlaneseq
    %v293 = vshrl.u32 %v292, 7
    %v294 = vsub.s32 0, %v293
    %v295 = vrot.slane %v122, %v294
    %v296 = vlaneseq
    %v297 = vshrl.u32 %v296, 7
    %v298 = vsub.s32 0, %v297
    %v299 = vrot.slane %v123, %v298
    %v300 = vlaneseq
    %v301 = vshrl.u32 %v300, 7
    %v302 = vsub.s32 0, %v301
    %v303 = vrot.slane %v124, %v302
    %v304 = vlaneseq
    %v305 = vshrl.u32 %v304, 7
    %v306 = vsub.s32 0, %v305
    %v307 = vrot.slane %v125, %v306
    %v308 = vlaneseq
    %v309 = vshrl.u32 %v308, 7
    %v310 = vsub.s32 0, %v309
    %v311 = vrot.slane %v126, %v310
    %v312 = vlaneseq
    %v313 = vshrl.u32 %v312, 7
    %v314 = vsub.s32 0, %v313
    %v315 = vrot.slane %v127, %v314
    %v316 = vlaneseq
    %v317 = vshrl.u32 %v316, 7
    %v318 = vsub.s32 0, %v317
    %v319 = vrot.slane %v128, %v318
    %v320 = vlaneseq
    %v321 = vshrl.u32 %v320, 7
    %v322 = vsub.s32 0, %v321
    %v323 = vrot.slane %v129, %v322
    %v324 = vlaneseq
    %v325 = vshrl.u32 %v324, 7
    %v326 = vsub.s32 0, %v325
    %v327 = vrot.slane %v130, %v326
    %v328 = vlaneseq
    %v329 = vshrl.u32 %v328, 7
    %v330 = vsub.s32 0, %v329
    %v331 = vrot.slane %v131, %v330
    %v332 = vlaneseq
    %v333 = vshrl.u32 %v332, 7
    %v334 = vsub.s32 0, %v333
    %v335 = vrot.slane %v132, %v334
    %v336 = vlaneseq
    %v337 = vshrl.u32 %v336, 7
    %v338 = vsub.s32 0, %v337
    %v339 = vrot.slane %v133, %v338
    %v340 = vlaneseq
    %v341 = vshrl.u32 %v340, 7
    %v342 = vsub.s32 0, %v341
    %v343 = vrot.slane %v134, %v342
    %v344 = vlaneseq
    %v345 = vshrl.u32 %v344, 7
    %v346 = vsub.s32 0, %v345
    %v347 = vrot.slane %v135, %v346
    %v348 = vlaneseq
    %v349 = vshrl.u32 %v348, 7
    %v350 = vsub.s32 0, %v349
    %v351 = vrot.slane %v136, %v350
    %v352 = vlaneseq
    %v353 = vshrl.u32 %v352, 7
    %v354 = vsub.s32 0, %v353
    %v355 = vrot.slane %v137, %v354
    %v356 = vlaneseq
    %v357 = vshrl.u32 %v356, 7
    %v358 = vsub.s32 0, %v357
    %v359 = vrot.slane %v138, %v358
    %v360 = vlaneseq
    %v361 = vshrl.u32 %v360, 7
    %v362 = vsub.s32 0, %v361
    %v363 = vrot.slane %v139, %v362
    %v364 = vlaneseq
    %v365 = vshrl.u32 %v364, 7
    %v366 = vsub.s32 0, %v365
    %v367 = vrot.slane %v140, %v366
    %v368 = vlaneseq
    %v369 = vshrl.u32 %v368, 7
    %v370 = vsub.s32 0, %v369
    %v371 = vrot.slane %v141, %v370
    %v372 = vlaneseq
    %v373 = vshrl.u32 %v372, 7
    %v374 = vsub.s32 0, %v373
    %v375 = vrot.slane %v142, %v374
    %v376 = vlaneseq
    %v377 = vshrl.u32 %v376, 7
    %v378 = vsub.s32 0, %v377
    %v379 = vrot.slane %v143, %v378
    %v380 = vlaneseq
    %v381 = vshrl.u32 %v380, 7
    %v382 = vsub.s32 0, %v381
    %v383 = vrot.slane %v144, %v382
    %v384 = vlaneseq
    %v385 = vshrl.u32 %v384, 7
    %v386 = vsub.s32 0, %v385
    %v387 = vrot.slane %v145, %v386
    %v388 = vlaneseq
    %v389 = vshrl.u32 %v388, 7
    %v390 = vsub.s32 0, %v389
    %v391 = vrot.slane %v146, %v390
    %v392 = vlaneseq
    %v393 = vshrl.u32 %v392, 7
    %v394 = vsub.s32 0, %v393
    %v395 = vrot.slane %v147, %v394
    %v396 = vlaneseq
    %v397 = vshrl.u32 %v396, 7
    %v398 = vsub.s32 0, %v397
    %v399 = vrot.slane %v148, %v398
    %v400 = vlaneseq
    %v401 = vshrl.u32 %v400, 7
    %v402 = vsub.s32 0, %v401
    %v403 = vrot.slane %v149, %v402
    %v404 = vlaneseq
    %v405 = vshrl.u32 %v404, 7
    %v406 = vsub.s32 0, %v405
    %v407 = vrot.slane %v150, %v406
    %v408 = vlaneseq
    %v409 = vshrl.u32 %v408, 7
    %v410 = vsub.s32 0, %v409
    %v411 = vrot.slane %v151, %v410
    %v412 = vlaneseq
    %v413 = vshrl.u32 %v412, 7
    %v414 = vsub.s32 0, %v413
    %v415 = vrot.slane %v152, %v414
    %v416 = vlaneseq
    %v417 = vshrl.u32 %v416, 7
    %v418 = vsub.s32 0, %v417
    %v419 = vrot.slane %v153, %v418
    %v420 = vlaneseq
    %v421 = vshrl.u32 %v420, 7
    %v422 = vsub.s32 0, %v421
    %v423 = vrot.slane %v154, %v422
    %v424 = vlaneseq
    %v425 = vshrl.u32 %v424, 7
    %v426 = vsub.s32 0, %v425
    %v427 = vrot.slane %v155, %v426
    %v428 = vlaneseq
    %v429 = vshrl.u32 %v428, 7
    %v430 = vsub.s32 0, %v429
    %v431 = vrot.slane %v156, %v430
    %v432 = vlaneseq
    %v433 = vshrl.u32 %v432, 7
    %v434 = vsub.s32 0, %v433
    %v435 = vrot.slane %v157, %v434
    %v436 = vlaneseq
    %v437 = vshrl.u32 %v436, 7
    %v438 = vsub.s32 0, %v437
    %v439 = vrot.slane %v158, %v438
    %v440 = vlaneseq
    %v441 = vshrl.u32 %v440, 7
    %v442 = vsub.s32 0, %v441
    %v443 = vrot.slane %v159, %v442
    %v444 = vlaneseq
    %v445 = vshrl.u32 %v444, 7
    %v446 = vsub.s32 0, %v445
    %v447 = vrot.slane %v160, %v446
    %v448 = vlaneseq
    %v449 = vshrl.u32 %v448, 7
    %v450 = vsub.s32 0, %v449
    %v451 = vrot.slane %v161, %v450
    %v452 = vlaneseq
    %v453 = vshrl.u32 %v452, 7
    %v454 = vsub.s32 0, %v453
    %v455 = vrot.slane %v162, %v454
    %v456 = vlaneseq
    %v457 = vshrl.u32 %v456, 7
    %v458 = vsub.s32 0, %v457
    %v459 = vrot.slane %v163, %v458
    %v460 = vlaneseq
    %v461 = vshrl.u32 %v460, 7
    %v462 = vsub.s32 0, %v461
    %v463 = vrot.slane %v164, %v462
    %v464 = vlaneseq
    %v465 = vshrl.u32 %v464, 7
    %v466 = vsub.s32 0, %v465
    %v467 = vrot.slane %v165, %v466
    %v468 = vlaneseq
    %v469 = vshrl.u32 %v468, 7
    %v470 = vsub.s32 0, %v469
    %v471 = vrot.slane %v166, %v470
    %v472 = vlaneseq
    %v473 = vshrl.u32 %v472, 7
    %v474 = vsub.s32 0, %v473
    %v475 = vrot.slane %v167, %v474
    %v476 = vlaneseq
    %v477 = vshrl.u32 %v476, 7
    %v478 = vsub.s32 0, %v477
    %v479 = vrot.slane %v168, %v478
    %v480 = vlaneseq
    %v481 = vshrl.u32 %v480, 7
    %v482 = vsub.s32 0, %v481
    %v483 = vrot.slane %v169, %v482
    %v484 = vlaneseq
    %v485 = vshrl.u32 %v484, 7
    %v486 = vsub.s32 0, %v485
    %v487 = vrot.slane %v170, %v486
    %v488 = vlaneseq
    %v489 = vshrl.u32 %v488, 7
    %v490 = vsub.s32 0, %v489
    %v491 = vrot.slane %v171, %v490
    %v556 = vadd.f32 %v44, %v239
    %v557 = vadd.f32 %v45, %v243
    %v558 = vadd.f32 %v46, %v247
    %v559 = vadd.f32 %v47, %v251
    %v560 = vadd.f32 %v48, %v255
    %v561 = vadd.f32 %v49, %v259
    %v562 = vadd.f32 %v50, %v263
    %v563 = vadd.f32 %v51, %v267
    %v564 = vadd.f32 %v52, %v271
    %v565 = vadd.f32 %v53, %v275
    %v566 = vadd.f32 %v54, %v279
    %v567 = vadd.f32 %v55, %v283
    %v568 = vadd.f32 %v56, %v287
    %v569 = vadd.f32 %v57, %v291
    %v570 = vadd.f32 %v58, %v295
    %v571 = vadd.f32 %v59, %v299
    %v572 = vadd.f32 %v60, %v303
    %v573 = vadd.f32 %v61, %v307
    %v574 = vadd.f32 %v62, %v311
    %v575 = vadd.f32 %v63, %v315
    %v576 = vadd.f32 %v64, %v319
    %v577 = vadd.f32 %v65, %v323
    %v578 = vadd.f32 %v66, %v327
    %v579 = vadd.f32 %v67, %v331
    %v580 = vadd.f32 %v68, %v335
    %v581 = vadd.f32 %v69, %v339
    %v582 = vadd.f32 %v70, %v343
    %v583 = vadd.f32 %v71, %v347
    %v584 = vadd.f32 %v72, %v351
    %v585 = vadd.f32 %v73, %v355
    %v586 = vadd.f32 %v74, %v359
    %v587 = vadd.f32 %v75, %v363
    %v588 = vadd.f32 %v76, %v367
    %v589 = vadd.f32 %v77, %v371
    %v590 = vadd.f32 %v78, %v375
    %v591 = vadd.f32 %v79, %v379
    %v592 = vadd.f32 %v80, %v383
    %v593 = vadd.f32 %v81, %v387
    %v594 = vadd.f32 %v82, %v391
    %v595 = vadd.f32 %v83, %v395
    %v596 = vadd.f32 %v84, %v399
    %v597 = vadd.f32 %v85, %v403
    %v598 = vadd.f32 %v86, %v407
    %v599 = vadd.f32 %v87, %v411
    %v600 = vadd.f32 %v88, %v415
    %v601 = vadd.f32 %v89, %v419
    %v602 = vadd.f32 %v90, %v423
    %v603 = vadd.f32 %v91, %v427
    %v604 = vadd.f32 %v92, %v431
    %v605 = vadd.f32 %v93, %v435
    %v606 = vadd.f32 %v94, %v439
    %v607 = vadd.f32 %v95, %v443
    %v608 = vadd.f32 %v96, %v447
    %v609 = vadd.f32 %v97, %v451
    %v610 = vadd.f32 %v98, %v455
    %v611 = vadd.f32 %v99, %v459
    %v612 = vadd.f32 %v100, %v463
    %v613 = vadd.f32 %v101, %v467
    %v614 = vadd.f32 %v102, %v471
    %v615 = vadd.f32 %v103, %v475
    %v616 = vadd.f32 %v104, %v479
    %v617 = vadd.f32 %v105, %v483
    %v618 = vadd.f32 %v106, %v487
    %v619 = vadd.f32 %v107, %v491
    %620 = vst [vmem:[#allocation8] sm:$0xff] %v556
    %621 = vst [vmem:[#allocation8 + $0x8] sm:$0xff] %v557
    %622 = vst [vmem:[#allocation8 + $0x10] sm:$0xff] %v558
    %623 = vst [vmem:[#allocation8 + $0x18] sm:$0xff] %v559
    %624 = vst [vmem:[#allocation8 + $0x20] sm:$0xff] %v560
    %625 = vst [vmem:[#allocation8 + $0x28] sm:$0xff] %v561
    %626 = vst [vmem:[#allocation8 + $0x30] sm:$0xff] %v562
    %627 = vst [vmem:[#allocation8 + $0x38] sm:$0xff] %v563
    %628 = vst [vmem:[#allocation8 + $0x40] sm:$0xff] %v564
    %629 = vst [vmem:[#allocation8 + $0x48] sm:$0xff] %v565
    %630 = vst [vmem:[#allocation8 + $0x50] sm:$0xff] %v566
    %631 = vst [vmem:[#allocation8 + $0x58] sm:$0xff] %v567
    %632 = vst [vmem:[#allocation8 + $0x60] sm:$0xff] %v568
    %633 = vst [vmem:[#allocation8 + $0x68] sm:$0xff] %v569
    %634 = vst [vmem:[#allocation8 + $0x70] sm:$0xff] %v570
    %635 = vst [vmem:[#allocation8 + $0x78] sm:$0xff] %v571
    %636 = vst [vmem:[#allocation8 + $0x80] sm:$0xff] %v572
    %637 = vst [vmem:[#allocation8 + $0x88] sm:$0xff] %v573
    %638 = vst [vmem:[#allocation8 + $0x90] sm:$0xff] %v574
    %639 = vst [vmem:[#allocation8 + $0x98] sm:$0xff] %v575
    %640 = vst [vmem:[#allocation8 + $0xa0] sm:$0xff] %v576
    %641 = vst [vmem:[#allocation8 + $0xa8] sm:$0xff] %v577
    %642 = vst [vmem:[#allocation8 + $0xb0] sm:$0xff] %v578
    %643 = vst [vmem:[#allocation8 + $0xb8] sm:$0xff] %v579
    %644 = vst [vmem:[#allocation8 + $0xc0] sm:$0xff] %v580
    %645 = vst [vmem:[#allocation8 + $0xc8] sm:$0xff] %v581
    %646 = vst [vmem:[#allocation8 + $0xd0] sm:$0xff] %v582
    %647 = vst [vmem:[#allocation8 + $0xd8] sm:$0xff] %v583
    %648 = vst [vmem:[#allocation8 + $0xe0] sm:$0xff] %v584
    %649 = vst [vmem:[#allocation8 + $0xe8] sm:$0xff] %v585
    %650 = vst [vmem:[#allocation8 + $0xf0] sm:$0xff] %v586
    %651 = vst [vmem:[#allocation8 + $0xf8] sm:$0xff] %v587
    %652 = vst [vmem:[#allocation8 + $0x100] sm:$0xff] %v588
    %653 = vst [vmem:[#allocation8 + $0x108] sm:$0xff] %v589
    %654 = vst [vmem:[#allocation8 + $0x110] sm:$0xff] %v590
    %655 = vst [vmem:[#allocation8 + $0x118] sm:$0xff] %v591
    %656 = vst [vmem:[#allocation8 + $0x120] sm:$0xff] %v592
    %657 = vst [vmem:[#allocation8 + $0x128] sm:$0xff] %v593
    %658 = vst [vmem:[#allocation8 + $0x130] sm:$0xff] %v594
    %659 = vst [vmem:[#allocation8 + $0x138] sm:$0xff] %v595
    %660 = vst [vmem:[#allocation8 + $0x140] sm:$0xff] %v596
    %661 = vst [vmem:[#allocation8 + $0x148] sm:$0xff] %v597
    %662 = vst [vmem:[#allocation8 + $0x150] sm:$0xff] %v598
    %663 = vst [vmem:[#allocation8 + $0x158] sm:$0xff] %v599
    %664 = vst [vmem:[#allocation8 + $0x160] sm:$0xff] %v600
    %665 = vst [vmem:[#allocation8 + $0x168] sm:$0xff] %v601
    %666 = vst [vmem:[#allocation8 + $0x170] sm:$0xff] %v602
    %667 = vst [vmem:[#allocation8 + $0x178] sm:$0xff] %v603
    %668 = vst [vmem:[#allocation8 + $0x180] sm:$0xff] %v604
    %669 = vst [vmem:[#allocation8 + $0x188] sm:$0xff] %v605
    %670 = vst [vmem:[#allocation8 + $0x190] sm:$0xff] %v606
    %671 = vst [vmem:[#allocation8 + $0x198] sm:$0xff] %v607
    %672 = vst [vmem:[#allocation8 + $0x1a0] sm:$0xff] %v608
    %673 = vst [vmem:[#allocation8 + $0x1a8] sm:$0xff] %v609
    %674 = vst [vmem:[#allocation8 + $0x1b0] sm:$0xff] %v610
    %675 = vst [vmem:[#allocation8 + $0x1b8] sm:$0xff] %v611
    %676 = vst [vmem:[#allocation8 + $0x1c0] sm:$0xff] %v612
    %677 = vst [vmem:[#allocation8 + $0x1c8] sm:$0xff] %v613
    %678 = vst [vmem:[#allocation8 + $0x1d0] sm:$0xff] %v614
    %679 = vst [vmem:[#allocation8 + $0x1d8] sm:$0xff] %v615
    %680 = vst [vmem:[#allocation8 + $0x1e0] sm:$0xff] %v616
    %681 = vst [vmem:[#allocation8 + $0x1e8] sm:$0xff] %v617
    %682 = vst [vmem:[#allocation8 + $0x1f0] sm:$0xff] %v618
    %683 = vst [vmem:[#allocation8 + $0x1f8] sm:$0xff] %v619
    // Predicated region
    $region22: #{tpu_custom_call.1} parent=1 // pred_check
      _
    $region23: #{tpu_custom_call.1} parent=1 // pred_check_branch
      %685 = sbr.rel (0) target = $region25
    $region24: #{tpu_custom_call.1} parent=1 // pred_region
      %s687 = ssub.s32 8192, 8192
      %688 = vsyncadd [#allocation5], %s687
      %s689 = sshll.u32 [#allocation8], 4
      %s690 = int_to_ptr.vmem [resolvable:$true] %s689
      %695 = dma.vmem_to_hbm [thread:$0]  %s690, 8192, %s3, [#allocation5], 128, 128, 8
    $region25: #{tpu_custom_call.1} parent=1 // pred_fallthru
      _
    // Predicated region
    $region26: #{tpu_custom_call.1} parent=1 // pred_check
      _
    $region27: #{tpu_custom_call.1} parent=1 // pred_check_branch
      %697 = sbr.rel (0) target = $region29
    $region28: #{tpu_custom_call.1} parent=1 // pred_region
      %698 = dma.done [#allocation5], 8192
    $region29: #{tpu_custom_call.1} parent=1 // pred_fallthru
      _
    %699 = vsyncpa [#allocation4], 1
    %700 = vsyncpa [#allocation7], 1
    %701 = vsyncpa [#allocation5], 1

</llo_original>
